<compile_context>
chip_gen: v6e
topology: v6e:2x2x1
jax: 0.10.0
libtpu: 0.0.40
codegen_flags: <defaults>
</compile_context>

<pallas_src>
import functools
import math

import jax
import jax.numpy as jnp
import numpy as np
from jax import lax
from jax.experimental import pallas as pl
from jax.experimental.pallas import tpu as pltpu


# --------------------------------------------------------------------------
# Helpers
# --------------------------------------------------------------------------
def _resident_spec(block_shape, index_map):
    """BlockSpec for a grid-invariant operand: single-buffered (its block never
    changes, so a second pipeline buffer is pure VMEM waste)."""
    try:
        return pl.BlockSpec(block_shape, index_map,
                            pipeline_mode=pl.Buffered(buffer_count=1))
    except (TypeError, AttributeError):   # older JAX without pipeline_mode
        return pl.BlockSpec(block_shape, index_map)


def _pick_block(total, preferred):
    """Largest divisor of `total` that is <= preferred and a multiple of 8,
    else fall back to the (always-legal) full extent."""
    b = min(preferred, total)
    if b == total:
        return total
    start = b - (b % 8)
    for cand in range(start, 7, -8):
        if total % cand == 0:
            return cand
    return total


def _device_defaults():
    kind = ""
    try:
        kind = jax.devices()[0].device_kind.lower()
    except Exception:
        pass
    if "v5 lite" in kind or "v5e" in kind or "v5lite" in kind:
        return 128, 96 * 1024 * 1024       # v5e: 128-wide tiles fill the 4x128 MXU
    if "v6" in kind:
        return 256, 100 * 1024 * 1024      # v6e: raise the 32 MiB scoped default
    if "v7" in kind:
        return 256, 48 * 1024 * 1024       # v7x: 64 MiB physical VMEM, keep headroom
    return 256, None


# --------------------------------------------------------------------------
# Kernel 1: fused QKV projection (one long matmul) + RoPE.
# Weights are column-permuted host-side so RoPE is pure elementwise
# (z * A + swap_halves(z) * B); the 1/sqrt(hd) scale is folded into A_q/B_q.
# --------------------------------------------------------------------------
def qkv_rope_kernel(x_ref, w_ref, aq_ref, bq_ref, ak_ref, bk_ref,
                    q_out, k_out, v_out,
                    *, n_heads, n_kv_heads, head_dim, compute_dtype):
    half = head_dim // 2
    x = x_ref[...].astype(compute_dtype)                          # (ts, D)
    qkv = jnp.dot(x, w_ref[...], preferred_element_type=jnp.float32)
    hq = n_heads * head_dim
    hkv = n_kv_heads * head_dim

    aq, bq = aq_ref[...], bq_ref[...]                              # (ts, hd)
    ak, bk = ak_ref[...], bk_ref[...]

    def rope(z, a, b):
        swapped = jnp.concatenate([z[:, half:], z[:, :half]], axis=-1)
        return z * a + swapped * b

    for h in range(n_heads):                                       # slice + store
        zh = qkv[:, h * head_dim:(h + 1) * head_dim]
        q_out[h] = rope(zh, aq, bq).astype(q_out.dtype)
    for h in range(n_kv_heads):
        zk = qkv[:, hq + h * head_dim: hq + (h + 1) * head_dim]
        k_out[h] = rope(zk, ak, bk).astype(k_out.dtype)
        zv = qkv[:, hq + hkv + h * head_dim: hq + hkv + (h + 1) * head_dim]
        v_out[h] = zv.astype(v_out.dtype)


# --------------------------------------------------------------------------
# Kernel 2: flash attention (GQA, causal), online softmax with VMEM scratch.
# --------------------------------------------------------------------------
def flash_attn_kernel(q_ref, k_ref, v_ref, o_ref,
                      m_ref, l_ref, acc_ref,
                      *, block_q, block_k, compute_dtype):
    qi = pl.program_id(2)
    ki = pl.program_id(3)
    NEG = -1e30

    @pl.when(ki == 0)
    def _init():
        m_ref[...] = jnp.full(m_ref.shape, NEG, jnp.float32)
        l_ref[...] = jnp.zeros(l_ref.shape, jnp.float32)
        acc_ref[...] = jnp.zeros(acc_ref.shape, jnp.float32)

    q_lo = qi * block_q
    q_hi = q_lo + block_q - 1
    k_lo = ki * block_k
    k_hi = k_lo + block_k - 1

    def update(masked):
        qh = q_ref[...].astype(compute_dtype)                       # (tq, hd), pre-scaled
        kh = k_ref[...].astype(compute_dtype)                       # (tk, hd)
        s = lax.dot_general(qh, kh, (((1,), (1,)), ((), ())),
                            preferred_element_type=jnp.float32)     # (tq, tk)
        if masked:
            q_pos = q_lo + lax.broadcasted_iota(jnp.int32, (block_q, block_k), 0)
            k_pos = k_lo + lax.broadcasted_iota(jnp.int32, (block_q, block_k), 1)
            s = jnp.where(k_pos <= q_pos, s, NEG)
        m_prev = m_ref[...]
        m_new = jnp.maximum(m_prev, jnp.max(s, axis=-1, keepdims=True))
        alpha = jnp.exp(m_prev - m_new)
        p = jnp.exp(s - m_new)
        l_ref[...] = alpha * l_ref[...] + jnp.sum(p, axis=-1, keepdims=True)
        acc_ref[...] = alpha * acc_ref[...] + lax.dot_general(
            p.astype(compute_dtype), v_ref[...].astype(compute_dtype),
            (((1,), (0,)), ((), ())), preferred_element_type=jnp.float32)
        m_ref[...] = m_new

    below = k_hi <= q_lo                                   # fully below diag: no mask
    straddle = jnp.logical_and(k_lo <= q_hi, jnp.logical_not(below))

    @pl.when(below)
    def _fast():
        update(masked=False)

    @pl.when(straddle)
    def _masked():
        update(masked=True)

    @pl.when(ki == pl.num_programs(3) - 1)
    def _finalize():
        inv_l = pl.reciprocal(l_ref[...], approx=True)      # EUP slot, off the VPU path
        o_ref[...] = (acc_ref[...] * inv_l).astype(o_ref.dtype)


# --------------------------------------------------------------------------
# Kernel 3: output projection.
# --------------------------------------------------------------------------
def oproj_flat_kernel(a_ref, wo_ref, o_ref, *, compute_dtype):
    # Lane-dense (ts, H*hd) input -> single full-D contraction.
    o_ref[...] = jnp.dot(a_ref[...].astype(compute_dtype), wo_ref[...],
                         preferred_element_type=jnp.float32).astype(o_ref.dtype)


def oproj_headmajor_kernel(a_ref, wo_ref, o_ref, *, n_heads, compute_dtype):
    heads = [a_ref[h] for h in range(n_heads)]              # each (ts, hd)
    xcat = jnp.concatenate(heads, axis=-1).astype(compute_dtype)
    o_ref[...] = jnp.dot(xcat, wo_ref[...],
                         preferred_element_type=jnp.float32).astype(o_ref.dtype)


# --------------------------------------------------------------------------
# Host-side prep -- done ONCE at weight-load time, not per forward call.
# --------------------------------------------------------------------------
def precompute_mha_params(wq, wk, wv, wo, *, n_heads, n_kv_heads, seq_len,
                          base=10000.0, param_dtype=jnp.bfloat16):
    D = wq.shape[0]
    head_dim = D // n_heads

    # De-interleave even/odd RoPE lanes by permuting weight columns.
    perm = np.concatenate([np.arange(0, head_dim, 2), np.arange(1, head_dim, 2)])
    qcols = np.concatenate([h * head_dim + perm for h in range(n_heads)])
    kcols = np.concatenate([h * head_dim + perm for h in range(n_kv_heads)])
    wq_p = jnp.asarray(wq)[:, qcols]
    wk_p = jnp.asarray(wk)[:, kcols]

    # Fused QKV weight -> one long MXU matmul per seq tile.
    w_qkv = jnp.concatenate([wq_p, wk_p, jnp.asarray(wv)], axis=1).astype(param_dtype)
    wo_c = jnp.asarray(wo).astype(param_dtype)

    # RoPE tables: out = z*A + swap_halves(z)*B ; A=[cos|cos], B=[-sin|sin].
    inv_freq = 1.0 / (base ** (np.arange(0, head_dim, 2, dtype=np.float32) / head_dim))
    freqs = np.outer(np.arange(seq_len, dtype=np.float32), inv_freq)
    cos, sin = np.cos(freqs), np.sin(freqs)
    A = np.concatenate([cos, cos], axis=-1).astype(np.float32)
    Bt = np.concatenate([-sin, sin], axis=-1).astype(np.float32)
    scale = 1.0 / math.sqrt(head_dim)                       # folded into Q tables
    return dict(
        w_qkv=w_qkv, wo=wo_c,
        aq=jnp.asarray(A * scale), bq=jnp.asarray(Bt * scale),
        ak=jnp.asarray(A), bk=jnp.asarray(Bt),
        n_heads=n_heads, n_kv_heads=n_kv_heads, head_dim=head_dim, seq_len=seq_len,
    )


# --------------------------------------------------------------------------
# Forward
# --------------------------------------------------------------------------
def mha_forward(x, params, *, block_s=None, block_q=None, block_k=None,
                compute_dtype=jnp.bfloat16, io_dtype=jnp.bfloat16,
                vmem_limit_bytes=None):
    B, S, D = x.shape
    n_heads = params["n_heads"]
    n_kv_heads = params["n_kv_heads"]
    head_dim = params["head_dim"]
    assert S == params["seq_len"], "RoPE tables were built for a different seq_len"
    n_rep = n_heads // n_kv_heads

    blk_default, vmem_default = _device_defaults()
    if vmem_limit_bytes is None:
        vmem_limit_bytes = vmem_default
    block_s = _pick_block(S, block_s or blk_default)
    block_q = _pick_block(S, block_q or blk_default)
    block_k = _pick_block(S, block_k or blk_default)

    cp_extra = {}
    if vmem_limit_bytes is not None:
        cp_extra["vmem_limit_bytes"] = int(vmem_limit_bytes)

    io_dtype = jnp.dtype(io_dtype)
    q_cols = n_heads * head_dim
    kv_cols = n_kv_heads * head_dim
    tot_cols = q_cols + 2 * kv_cols

    # ---------------- pass 1: fused QKV + RoPE ----------------
    q, k, v = pl.pallas_call(
        functools.partial(qkv_rope_kernel, n_heads=n_heads, n_kv_heads=n_kv_heads,
                          head_dim=head_dim, compute_dtype=compute_dtype),
        out_shape=(
            jax.ShapeDtypeStruct((B, n_heads, S, head_dim), io_dtype),
            jax.ShapeDtypeStruct((B, n_kv_heads, S, head_dim), io_dtype),
            jax.ShapeDtypeStruct((B, n_kv_heads, S, head_dim), io_dtype),
        ),
        grid=(B, S // block_s),
        in_specs=[
            pl.BlockSpec((None, block_s, D), lambda b, s: (b, s, 0)),
            _resident_spec((D, tot_cols), lambda b, s: (0, 0)),     # single-buffered weight
            pl.BlockSpec((block_s, head_dim), lambda b, s: (s, 0)),
            pl.BlockSpec((block_s, head_dim), lambda b, s: (s, 0)),
            pl.BlockSpec((block_s, head_dim), lambda b, s: (s, 0)),
            pl.BlockSpec((block_s, head_dim), lambda b, s: (s, 0)),
        ],
        out_specs=(
            pl.BlockSpec((None, n_heads, block_s, head_dim), lambda b, s: (b, 0, s, 0)),
            pl.BlockSpec((None, n_kv_heads, block_s, head_dim), lambda b, s: (b, 0, s, 0)),
            pl.BlockSpec((None, n_kv_heads, block_s, head_dim), lambda b, s: (b, 0, s, 0)),
        ),
        compiler_params=pltpu.CompilerParams(
            dimension_semantics=("parallel", "parallel"), **cp_extra),
    )(x, params["w_qkv"], params["aq"], params["bq"], params["ak"], params["bk"])

    # ---------------- pass 2: flash attention (GQA, causal) ----------------
    # Clamp the kv block index so causally-skipped steps map to the already
    # resident block -> no wasted DMA.
    def kv_map(b, h, qi, ki):
        max_kv = (qi * block_q + block_q - 1) // block_k
        return (b, h // n_rep, jnp.minimum(ki, max_kv), 0)

    flat = (head_dim % 128 == 0)
    if flat:
        attn_shape = (B, S, q_cols)                        # lane-dense flat layout
        attn_out_spec = pl.BlockSpec((None, block_q, head_dim),
                                     lambda b, h, qi, ki: (b, qi, h))
    else:
        attn_shape = (B, n_heads, S, head_dim)             # head-major fallback
        attn_out_spec = pl.BlockSpec((None, None, block_q, head_dim),
                                     lambda b, h, qi, ki: (b, h, qi, 0))

    attn = pl.pallas_call(
        functools.partial(flash_attn_kernel, block_q=block_q, block_k=block_k,
                          compute_dtype=compute_dtype),
        out_shape=jax.ShapeDtypeStruct(attn_shape, io_dtype),
        grid=(B, n_heads, S // block_q, S // block_k),
        in_specs=[
            pl.BlockSpec((None, None, block_q, head_dim),
                         lambda b, h, qi, ki: (b, h, qi, 0)),
            pl.BlockSpec((None, None, block_k, head_dim), kv_map),
            pl.BlockSpec((None, None, block_k, head_dim), kv_map),
        ],
        out_specs=attn_out_spec,
        scratch_shapes=[
            pltpu.VMEM((block_q, 1), jnp.float32),          # m
            pltpu.VMEM((block_q, 1), jnp.float32),          # l
            pltpu.VMEM((block_q, head_dim), jnp.float32),   # acc
        ],
        compiler_params=pltpu.CompilerParams(
            dimension_semantics=("parallel", "parallel", "parallel", "arbitrary"),
            **cp_extra),
    )(q, k, v)

    # ---------------- pass 3: output projection ----------------
    if flat:
        out = pl.pallas_call(
            functools.partial(oproj_flat_kernel, compute_dtype=compute_dtype),
            out_shape=jax.ShapeDtypeStruct((B, S, D), x.dtype),
            grid=(B, S // block_s),
            in_specs=[
                pl.BlockSpec((None, block_s, q_cols), lambda b, s: (b, s, 0)),
                _resident_spec((q_cols, D), lambda b, s: (0, 0)),
            ],
            out_specs=pl.BlockSpec((None, block_s, D), lambda b, s: (b, s, 0)),
            compiler_params=pltpu.CompilerParams(
                dimension_semantics=("parallel", "parallel"), **cp_extra),
        )(attn, params["wo"])
    else:
        out = pl.pallas_call(
            functools.partial(oproj_headmajor_kernel, n_heads=n_heads,
                              compute_dtype=compute_dtype),
            out_shape=jax.ShapeDtypeStruct((B, S, D), x.dtype),
            grid=(B, S // block_s),
            in_specs=[
                pl.BlockSpec((None, n_heads, block_s, head_dim), lambda b, s: (b, 0, s, 0)),
                _resident_spec((q_cols, D), lambda b, s: (0, 0)),
            ],
            out_specs=pl.BlockSpec((None, block_s, D), lambda b, s: (b, s, 0)),
            compiler_params=pltpu.CompilerParams(
                dimension_semantics=("parallel", "parallel"), **cp_extra),
        )(attn, params["wo"])
    return out


# --------------------------------------------------------------------------
# Pure-JAX reference (intended semantics of the PyTorch module, mask=None).
# --------------------------------------------------------------------------
def ref_forward(x, wq, wk, wv, wo, *, n_heads, n_kv_heads, base=10000.0):
    B, S, D = x.shape
    hd = D // n_heads
    q = (x @ wq).reshape(B, S, n_heads, hd)
    k = (x @ wk).reshape(B, S, n_kv_heads, hd)
    v = (x @ wv).reshape(B, S, n_kv_heads, hd)

    inv_freq = 1.0 / (base ** (jnp.arange(0, hd, 2).astype(jnp.float32) / hd))
    freqs = jnp.outer(jnp.arange(S, dtype=jnp.float32), inv_freq)
    cos = jnp.cos(freqs)[None, :, None, :]
    sin = jnp.sin(freqs)[None, :, None, :]

    def rope(z):
        z1, z2 = z[..., 0::2], z[..., 1::2]
        return jnp.concatenate([z1 * cos - z2 * sin, z1 * sin + z2 * cos], axis=-1)

    q, k = rope(q), rope(k)
    n_rep = n_heads // n_kv_heads
    k = jnp.repeat(k, n_rep, axis=2)
    v = jnp.repeat(v, n_rep, axis=2)
    q, k, v = (a.transpose(0, 2, 1, 3) for a in (q, k, v))
    scores = (q @ k.transpose(0, 1, 3, 2)) / np.sqrt(hd)
    mask = jnp.tril(jnp.ones((S, S), bool))
    scores = jnp.where(mask, scores, -jnp.inf)
    w = jax.nn.softmax(scores, axis=-1)
    out = (w @ v).transpose(0, 2, 1, 3).reshape(B, S, n_heads * hd)
    return out @ wo


if __name__ == "__main__":
    # Small, module-consistent shapes.
    B, S, DIM = 2, 16, 64
    N_HEADS, N_KV_HEADS = 4, 2
    HEAD_DIM = DIM // N_HEADS

    key = jax.random.PRNGKey(0)
    kx, kq, kk, kv, ko = jax.random.split(key, 5)
    x = jax.random.normal(kx, (B, S, DIM), dtype=jnp.float32)
    wq = 0.02 * jax.random.normal(kq, (DIM, N_HEADS * HEAD_DIM), dtype=jnp.float32)
    wk = 0.02 * jax.random.normal(kk, (DIM, N_KV_HEADS * HEAD_DIM), dtype=jnp.float32)
    wv = 0.02 * jax.random.normal(kv, (DIM, N_KV_HEADS * HEAD_DIM), dtype=jnp.float32)
    wo = 0.02 * jax.random.normal(ko, (N_HEADS * HEAD_DIM, DIM), dtype=jnp.float32)

    # Host-side prep once (fused Wqkv, permuted columns, RoPE tables).
    params = precompute_mha_params(wq, wk, wv, wo, n_heads=N_HEADS,
                                   n_kv_heads=N_KV_HEADS, seq_len=S)

    out = mha_forward(x, params)          # bf16 compute + bf16 intermediates (defaults)
    out = jax.block_until_ready(out)

    ref = ref_forward(x, wq, wk, wv, wo, n_heads=N_HEADS, n_kv_heads=N_KV_HEADS)
    # Tolerance accounts for bf16 weights/intermediates vs the f32 reference.
    np.testing.assert_allclose(np.asarray(out), np.asarray(ref), rtol=5e-2, atol=1e-2)

    print("KERNEL_OK")
</pallas_src>

<mosaic_0001>
module attributes {stable_mosaic.version = 11 : i64} {
  func.func @qkv_rope_kernel(%arg0: i32, %arg1: i32, %arg2: memref<1x16x64xf32, #tpu.memory_space<vmem>>, %arg3: memref<64x128xbf16, #tpu.memory_space<vmem>>, %arg4: memref<16x16xf32, #tpu.memory_space<vmem>>, %arg5: memref<16x16xf32, #tpu.memory_space<vmem>>, %arg6: memref<16x16xf32, #tpu.memory_space<vmem>>, %arg7: memref<16x16xf32, #tpu.memory_space<vmem>>, %arg8: memref<1x4x16x16xbf16, #tpu.memory_space<vmem>>, %arg9: memref<1x2x16x16xbf16, #tpu.memory_space<vmem>>, %arg10: memref<1x2x16x16xbf16, #tpu.memory_space<vmem>>) attributes {dimension_semantics = [#tpu.dimension_semantics<parallel>, #tpu.dimension_semantics<parallel>], iteration_bounds = array<i64: 2, 1>, scalar_prefetch = 0 : i64, scratch_operands = 0 : i64, tpu.core_type = #tpu.core_type<tc>, window_params = [{transform_indices = @transform_0, window_bounds = array<i64: 1, 16, 64>}, {pipeline_mode = #tpu.pipeline_mode<synchronous>, transform_indices = @transform_1, window_bounds = array<i64: 64, 128>}, {transform_indices = @transform_2, window_bounds = array<i64: 16, 16>}, {transform_indices = @transform_3, window_bounds = array<i64: 16, 16>}, {transform_indices = @transform_4, window_bounds = array<i64: 16, 16>}, {transform_indices = @transform_5, window_bounds = array<i64: 16, 16>}, {transform_indices = @transform_6, window_bounds = array<i64: 1, 4, 16, 16>}, {transform_indices = @transform_7, window_bounds = array<i64: 1, 2, 16, 16>}, {transform_indices = @transform_8, window_bounds = array<i64: 1, 2, 16, 16>}]} {
    %c0 = arith.constant 0 : index
    %c0_0 = arith.constant 0 : index
    %c0_1 = arith.constant 0 : index
    %0 = vector.load %arg2[%c0, %c0_0, %c0_1] : memref<1x16x64xf32, #tpu.memory_space<vmem>>, vector<1x16x64xf32>
    %1 = vector.shape_cast %0 : vector<1x16x64xf32> to vector<16x64xf32>
    %2 = arith.truncf %1 : vector<16x64xf32> to vector<16x64xbf16>
    %c0_2 = arith.constant 0 : index
    %c0_3 = arith.constant 0 : index
    %3 = vector.load %arg3[%c0_2, %c0_3] : memref<64x128xbf16, #tpu.memory_space<vmem>>, vector<64x128xbf16>
    %cst = arith.constant dense<0.000000e+00> : vector<16x128xf32>
    %4 = tpu.matmul %2, %3, %cst {dimension_numbers = #tpu.dot_dimension_numbers<[1], [0], [0], [1], [0, 0, 1, 1], [], []>} : vector<16x64xbf16>, vector<64x128xbf16>, vector<16x128xf32> -> vector<16x128xf32>
    %c0_4 = arith.constant 0 : index
    %c0_5 = arith.constant 0 : index
    %5 = vector.load %arg4[%c0_4, %c0_5] : memref<16x16xf32, #tpu.memory_space<vmem>>, vector<16x16xf32>
    %c0_6 = arith.constant 0 : index
    %c0_7 = arith.constant 0 : index
    %6 = vector.load %arg5[%c0_6, %c0_7] : memref<16x16xf32, #tpu.memory_space<vmem>>, vector<16x16xf32>
    %c0_8 = arith.constant 0 : index
    %c0_9 = arith.constant 0 : index
    %7 = vector.load %arg6[%c0_8, %c0_9] : memref<16x16xf32, #tpu.memory_space<vmem>>, vector<16x16xf32>
    %c0_10 = arith.constant 0 : index
    %c0_11 = arith.constant 0 : index
    %8 = vector.load %arg7[%c0_10, %c0_11] : memref<16x16xf32, #tpu.memory_space<vmem>>, vector<16x16xf32>
    %9 = vector.extract_strided_slice %4 {offsets = [0, 0], sizes = [16, 16], strides = [1, 1]} : vector<16x128xf32> to vector<16x16xf32>
    %10 = vector.extract_strided_slice %9 {offsets = [0, 8], sizes = [16, 8], strides = [1, 1]} : vector<16x16xf32> to vector<16x8xf32>
    %11 = vector.extract_strided_slice %9 {offsets = [0, 0], sizes = [16, 8], strides = [1, 1]} : vector<16x16xf32> to vector<16x8xf32>
    %12 = tpu.concatenate %10, %11 in 1 : vector<16x8xf32>, vector<16x8xf32> -> vector<16x16xf32>
    %13 = arith.mulf %9, %5 : vector<16x16xf32>
    %14 = arith.mulf %12, %6 : vector<16x16xf32>
    %15 = arith.addf %13, %14 : vector<16x16xf32>
    %16 = arith.truncf %15 : vector<16x16xf32> to vector<16x16xbf16>
    %c0_12 = arith.constant 0 : index
    %c0_13 = arith.constant 0 : index
    %c0_14 = arith.constant 0 : index
    %c0_15 = arith.constant 0 : index
    %17 = vector.load %arg8[%c0_12, %c0_13, %c0_14, %c0_15] : memref<1x4x16x16xbf16, #tpu.memory_space<vmem>>, vector<1x1x16x16xbf16>
    %18 = vector.shape_cast %17 : vector<1x1x16x16xbf16> to vector<16x16xbf16>
    %19 = vector.shape_cast %16 : vector<16x16xbf16> to vector<1x1x16x16xbf16>
    tpu.vector_store %arg8[%c0_12, %c0_13, %c0_14, %c0_15], %19 {strides = array<i32>} : memref<1x4x16x16xbf16, #tpu.memory_space<vmem>>, vector<1x1x16x16xbf16>,
    %20 = vector.extract_strided_slice %4 {offsets = [0, 16], sizes = [16, 16], strides = [1, 1]} : vector<16x128xf32> to vector<16x16xf32>
    %21 = vector.extract_strided_slice %20 {offsets = [0, 8], sizes = [16, 8], strides = [1, 1]} : vector<16x16xf32> to vector<16x8xf32>
    %22 = vector.extract_strided_slice %20 {offsets = [0, 0], sizes = [16, 8], strides = [1, 1]} : vector<16x16xf32> to vector<16x8xf32>
    %23 = tpu.concatenate %21, %22 in 1 : vector<16x8xf32>, vector<16x8xf32> -> vector<16x16xf32>
    %24 = arith.mulf %20, %5 : vector<16x16xf32>
    %25 = arith.mulf %23, %6 : vector<16x16xf32>
    %26 = arith.addf %24, %25 : vector<16x16xf32>
    %27 = arith.truncf %26 : vector<16x16xf32> to vector<16x16xbf16>
    %c0_16 = arith.constant 0 : index
    %c1 = arith.constant 1 : index
    %c0_17 = arith.constant 0 : index
    %c0_18 = arith.constant 0 : index
    %28 = vector.load %arg8[%c0_16, %c1, %c0_17, %c0_18] : memref<1x4x16x16xbf16, #tpu.memory_space<vmem>>, vector<1x1x16x16xbf16>
    %29 = vector.shape_cast %28 : vector<1x1x16x16xbf16> to vector<16x16xbf16>
    %30 = vector.shape_cast %27 : vector<16x16xbf16> to vector<1x1x16x16xbf16>
    tpu.vector_store %arg8[%c0_16, %c1, %c0_17, %c0_18], %30 {strides = array<i32>} : memref<1x4x16x16xbf16, #tpu.memory_space<vmem>>, vector<1x1x16x16xbf16>,
    %31 = vector.extract_strided_slice %4 {offsets = [0, 32], sizes = [16, 16], strides = [1, 1]} : vector<16x128xf32> to vector<16x16xf32>
    %32 = vector.extract_strided_slice %31 {offsets = [0, 8], sizes = [16, 8], strides = [1, 1]} : vector<16x16xf32> to vector<16x8xf32>
    %33 = vector.extract_strided_slice %31 {offsets = [0, 0], sizes = [16, 8], strides = [1, 1]} : vector<16x16xf32> to vector<16x8xf32>
    %34 = tpu.concatenate %32, %33 in 1 : vector<16x8xf32>, vector<16x8xf32> -> vector<16x16xf32>
    %35 = arith.mulf %31, %5 : vector<16x16xf32>
    %36 = arith.mulf %34, %6 : vector<16x16xf32>
    %37 = arith.addf %35, %36 : vector<16x16xf32>
    %38 = arith.truncf %37 : vector<16x16xf32> to vector<16x16xbf16>
    %c0_19 = arith.constant 0 : index
    %c2 = arith.constant 2 : index
    %c0_20 = arith.constant 0 : index
    %c0_21 = arith.constant 0 : index
    %39 = vector.load %arg8[%c0_19, %c2, %c0_20, %c0_21] : memref<1x4x16x16xbf16, #tpu.memory_space<vmem>>, vector<1x1x16x16xbf16>
    %40 = vector.shape_cast %39 : vector<1x1x16x16xbf16> to vector<16x16xbf16>
    %41 = vector.shape_cast %38 : vector<16x16xbf16> to vector<1x1x16x16xbf16>
    tpu.vector_store %arg8[%c0_19, %c2, %c0_20, %c0_21], %41 {strides = array<i32>} : memref<1x4x16x16xbf16, #tpu.memory_space<vmem>>, vector<1x1x16x16xbf16>,
    %42 = vector.extract_strided_slice %4 {offsets = [0, 48], sizes = [16, 16], strides = [1, 1]} : vector<16x128xf32> to vector<16x16xf32>
    %43 = vector.extract_strided_slice %42 {offsets = [0, 8], sizes = [16, 8], strides = [1, 1]} : vector<16x16xf32> to vector<16x8xf32>
    %44 = vector.extract_strided_slice %42 {offsets = [0, 0], sizes = [16, 8], strides = [1, 1]} : vector<16x16xf32> to vector<16x8xf32>
    %45 = tpu.concatenate %43, %44 in 1 : vector<16x8xf32>, vector<16x8xf32> -> vector<16x16xf32>
    %46 = arith.mulf %42, %5 : vector<16x16xf32>
    %47 = arith.mulf %45, %6 : vector<16x16xf32>
    %48 = arith.addf %46, %47 : vector<16x16xf32>
    %49 = arith.truncf %48 : vector<16x16xf32> to vector<16x16xbf16>
    %c0_22 = arith.constant 0 : index
    %c3 = arith.constant 3 : index
    %c0_23 = arith.constant 0 : index
    %c0_24 = arith.constant 0 : index
    %50 = vector.load %arg8[%c0_22, %c3, %c0_23, %c0_24] : memref<1x4x16x16xbf16, #tpu.memory_space<vmem>>, vector<1x1x16x16xbf16>
    %51 = vector.shape_cast %50 : vector<1x1x16x16xbf16> to vector<16x16xbf16>
    %52 = vector.shape_cast %49 : vector<16x16xbf16> to vector<1x1x16x16xbf16>
    tpu.vector_store %arg8[%c0_22, %c3, %c0_23, %c0_24], %52 {strides = array<i32>} : memref<1x4x16x16xbf16, #tpu.memory_space<vmem>>, vector<1x1x16x16xbf16>,
    %53 = vector.extract_strided_slice %4 {offsets = [0, 64], sizes = [16, 16], strides = [1, 1]} : vector<16x128xf32> to vector<16x16xf32>
    %54 = vector.extract_strided_slice %53 {offsets = [0, 8], sizes = [16, 8], strides = [1, 1]} : vector<16x16xf32> to vector<16x8xf32>
    %55 = vector.extract_strided_slice %53 {offsets = [0, 0], sizes = [16, 8], strides = [1, 1]} : vector<16x16xf32> to vector<16x8xf32>
    %56 = tpu.concatenate %54, %55 in 1 : vector<16x8xf32>, vector<16x8xf32> -> vector<16x16xf32>
    %57 = arith.mulf %53, %7 : vector<16x16xf32>
    %58 = arith.mulf %56, %8 : vector<16x16xf32>
    %59 = arith.addf %57, %58 : vector<16x16xf32>
    %60 = arith.truncf %59 : vector<16x16xf32> to vector<16x16xbf16>
    %c0_25 = arith.constant 0 : index
    %c0_26 = arith.constant 0 : index
    %c0_27 = arith.constant 0 : index
    %c0_28 = arith.constant 0 : index
    %61 = vector.load %arg9[%c0_25, %c0_26, %c0_27, %c0_28] : memref<1x2x16x16xbf16, #tpu.memory_space<vmem>>, vector<1x1x16x16xbf16>
    %62 = vector.shape_cast %61 : vector<1x1x16x16xbf16> to vector<16x16xbf16>
    %63 = vector.shape_cast %60 : vector<16x16xbf16> to vector<1x1x16x16xbf16>
    tpu.vector_store %arg9[%c0_25, %c0_26, %c0_27, %c0_28], %63 {strides = array<i32>} : memref<1x2x16x16xbf16, #tpu.memory_space<vmem>>, vector<1x1x16x16xbf16>,
    %64 = vector.extract_strided_slice %4 {offsets = [0, 96], sizes = [16, 16], strides = [1, 1]} : vector<16x128xf32> to vector<16x16xf32>
    %65 = arith.truncf %64 : vector<16x16xf32> to vector<16x16xbf16>
    %c0_29 = arith.constant 0 : index
    %c0_30 = arith.constant 0 : index
    %c0_31 = arith.constant 0 : index
    %c0_32 = arith.constant 0 : index
    %66 = vector.load %arg10[%c0_29, %c0_30, %c0_31, %c0_32] : memref<1x2x16x16xbf16, #tpu.memory_space<vmem>>, vector<1x1x16x16xbf16>
    %67 = vector.shape_cast %66 : vector<1x1x16x16xbf16> to vector<16x16xbf16>
    %68 = vector.shape_cast %65 : vector<16x16xbf16> to vector<1x1x16x16xbf16>
    tpu.vector_store %arg10[%c0_29, %c0_30, %c0_31, %c0_32], %68 {strides = array<i32>} : memref<1x2x16x16xbf16, #tpu.memory_space<vmem>>, vector<1x1x16x16xbf16>,
    %69 = vector.extract_strided_slice %4 {offsets = [0, 80], sizes = [16, 16], strides = [1, 1]} : vector<16x128xf32> to vector<16x16xf32>
    %70 = vector.extract_strided_slice %69 {offsets = [0, 8], sizes = [16, 8], strides = [1, 1]} : vector<16x16xf32> to vector<16x8xf32>
    %71 = vector.extract_strided_slice %69 {offsets = [0, 0], sizes = [16, 8], strides = [1, 1]} : vector<16x16xf32> to vector<16x8xf32>
    %72 = tpu.concatenate %70, %71 in 1 : vector<16x8xf32>, vector<16x8xf32> -> vector<16x16xf32>
    %73 = arith.mulf %69, %7 : vector<16x16xf32>
    %74 = arith.mulf %72, %8 : vector<16x16xf32>
    %75 = arith.addf %73, %74 : vector<16x16xf32>
    %76 = arith.truncf %75 : vector<16x16xf32> to vector<16x16xbf16>
    %c0_33 = arith.constant 0 : index
    %c1_34 = arith.constant 1 : index
    %c0_35 = arith.constant 0 : index
    %c0_36 = arith.constant 0 : index
    %77 = vector.load %arg9[%c0_33, %c1_34, %c0_35, %c0_36] : memref<1x2x16x16xbf16, #tpu.memory_space<vmem>>, vector<1x1x16x16xbf16>
    %78 = vector.shape_cast %77 : vector<1x1x16x16xbf16> to vector<16x16xbf16>
    %79 = vector.shape_cast %76 : vector<16x16xbf16> to vector<1x1x16x16xbf16>
    tpu.vector_store %arg9[%c0_33, %c1_34, %c0_35, %c0_36], %79 {strides = array<i32>} : memref<1x2x16x16xbf16, #tpu.memory_space<vmem>>, vector<1x1x16x16xbf16>,
    %80 = vector.extract_strided_slice %4 {offsets = [0, 112], sizes = [16, 16], strides = [1, 1]} : vector<16x128xf32> to vector<16x16xf32>
    %81 = arith.truncf %80 : vector<16x16xf32> to vector<16x16xbf16>
    %c0_37 = arith.constant 0 : index
    %c1_38 = arith.constant 1 : index
    %c0_39 = arith.constant 0 : index
    %c0_40 = arith.constant 0 : index
    %82 = vector.load %arg10[%c0_37, %c1_38, %c0_39, %c0_40] : memref<1x2x16x16xbf16, #tpu.memory_space<vmem>>, vector<1x1x16x16xbf16>
    %83 = vector.shape_cast %82 : vector<1x1x16x16xbf16> to vector<16x16xbf16>
    %84 = vector.shape_cast %81 : vector<16x16xbf16> to vector<1x1x16x16xbf16>
    tpu.vector_store %arg10[%c0_37, %c1_38, %c0_39, %c0_40], %84 {strides = array<i32>} : memref<1x2x16x16xbf16, #tpu.memory_space<vmem>>, vector<1x1x16x16xbf16>,
    return
  }
  func.func @transform_0(%arg0: i32, %arg1: i32) -> (i32, i32, i32) {
    %c0_i32 = arith.constant 0 : i32
    %c0_i32_0 = arith.constant 0 : i32
    return %arg0, %arg1, %c0_i32 : i32, i32, i32
  }
  func.func @transform_1(%arg0: i32, %arg1: i32) -> (i32, i32) {
    %c0_i32 = arith.constant 0 : i32
    %c0_i32_0 = arith.constant 0 : i32
    %c0_i32_1 = arith.constant 0 : i32
    return %c0_i32, %c0_i32_0 : i32, i32
  }
  func.func @transform_2(%arg0: i32, %arg1: i32) -> (i32, i32) {
    %c0_i32 = arith.constant 0 : i32
    %c0_i32_0 = arith.constant 0 : i32
    return %arg1, %c0_i32 : i32, i32
  }
  func.func @transform_3(%arg0: i32, %arg1: i32) -> (i32, i32) {
    %c0_i32 = arith.constant 0 : i32
    %c0_i32_0 = arith.constant 0 : i32
    return %arg1, %c0_i32 : i32, i32
  }
  func.func @transform_4(%arg0: i32, %arg1: i32) -> (i32, i32) {
    %c0_i32 = arith.constant 0 : i32
    %c0_i32_0 = arith.constant 0 : i32
    return %arg1, %c0_i32 : i32, i32
  }
  func.func @transform_5(%arg0: i32, %arg1: i32) -> (i32, i32) {
    %c0_i32 = arith.constant 0 : i32
    %c0_i32_0 = arith.constant 0 : i32
    return %arg1, %c0_i32 : i32, i32
  }
  func.func @transform_6(%arg0: i32, %arg1: i32) -> (i32, i32, i32, i32) {
    %c0_i32 = arith.constant 0 : i32
    %c0_i32_0 = arith.constant 0 : i32
    %c0_i32_1 = arith.constant 0 : i32
    return %arg0, %c0_i32, %arg1, %c0_i32_0 : i32, i32, i32, i32
  }
  func.func @transform_7(%arg0: i32, %arg1: i32) -> (i32, i32, i32, i32) {
    %c0_i32 = arith.constant 0 : i32
    %c0_i32_0 = arith.constant 0 : i32
    %c0_i32_1 = arith.constant 0 : i32
    return %arg0, %c0_i32, %arg1, %c0_i32_0 : i32, i32, i32, i32
  }
  func.func @transform_8(%arg0: i32, %arg1: i32) -> (i32, i32, i32, i32) {
    %c0_i32 = arith.constant 0 : i32
    %c0_i32_0 = arith.constant 0 : i32
    %c0_i32_1 = arith.constant 0 : i32
    return %arg0, %c0_i32, %arg1, %c0_i32_0 : i32, i32, i32, i32
  }
}

</mosaic_0001>

<llo_original>
// kernel: tpu_custom_call.1
$region0: #{tpu_custom_call.1}
  #allocation0 [shape = 'u32[]', space=smem, size = 0x4, offset = 0x4, fixed_abs, tag = 'smem constant byte address 0x4 - core index']
  #allocation1 [shape = 'u32[144,128]{1,0:T(1,128)}', space=vmem, size = 0x12000, scoped, tag = 'internal scratch']
  %s0 = inlined_call_operand.hbm [shape: f32[2,16,64], index: 0, kind: input, shape index: {}]
  %s1 = inlined_call_operand.hbm [shape: bf16[64,128], index: 1, kind: input, shape index: {}]
  %s2 = inlined_call_operand.hbm [shape: f32[16,16], index: 2, kind: input, shape index: {}]
  %s3 = inlined_call_operand.hbm [shape: f32[16,16], index: 3, kind: input, shape index: {}]
  %s4 = inlined_call_operand.hbm [shape: f32[16,16], index: 4, kind: input, shape index: {}]
  %s5 = inlined_call_operand.hbm [shape: f32[16,16], index: 5, kind: input, shape index: {}]
  %s6 = inlined_call_operand.hbm [shape: bf16[2,4,16,16], index: 6, kind: output, shape index: {0}]
  %s7 = inlined_call_operand.hbm [shape: bf16[2,2,16,16], index: 7, kind: output, shape index: {1}]
  %s8 = inlined_call_operand.hbm [shape: bf16[2,2,16,16], index: 8, kind: output, shape index: {2}]
  %9 = xla_tuple %s6, %s7, %s8
  %s10 = sld [smem:[#allocation0]]
  $region97: #{tpu_custom_call.1} parent=0
    _
  %s12 = ssub.s32 1, %s10
  %s13 = scalar_select 0, %s12, %s10
  $region1: #{tpu_custom_call.1} parent=0
    #allocation2 [shape = 'u8[16384]{0}', space=vmem, size = 0x4000, scoped, tag = 'input window, operand 0']
    #allocation3 [shape = 's32[2]{0}', space=sflag, size = 0x8, scoped, tag = 'scoped memory for tpu_custom_call.1']
    #allocation4 [shape = 's32[2]{0}', space=sflag, size = 0x8, scoped, tag = 'scoped memory for tpu_custom_call.1']
    #allocation5 [shape = 'u8[16384]{0}', space=vmem, size = 0x4000, scoped, tag = 'input window, operand 1, single buffered']
    #allocation6 [shape = 's32[1]{0}', space=sflag, size = 0x4, scoped, tag = 'scoped memory for tpu_custom_call.1']
    #allocation7 [shape = 'u8[8192]{0}', space=vmem, size = 0x2000, scoped, tag = 'input window, operand 2, single buffered']
    #allocation8 [shape = 'u8[8192]{0}', space=vmem, size = 0x2000, scoped, tag = 'input window, operand 3, single buffered']
    #allocation9 [shape = 's32[1]{0}', space=sflag, size = 0x4, scoped, tag = 'scoped memory for tpu_custom_call.1']
    #allocation10 [shape = 'u8[8192]{0}', space=vmem, size = 0x2000, scoped, tag = 'input window, operand 4, single buffered']
    #allocation11 [shape = 'u8[8192]{0}', space=vmem, size = 0x2000, scoped, tag = 'input window, operand 5, single buffered']
    #allocation12 [shape = 's32[1]{0}', space=sflag, size = 0x4, scoped, tag = 'scoped memory for tpu_custom_call.1']
    #allocation13 [shape = 'u8[32768]{0}', space=vmem, size = 0x8000, scoped, tag = 'output window, operand 0']
    #allocation14 [shape = 'u8[16384]{0}', space=vmem, size = 0x4000, scoped, tag = 'output window, operand 1']
    #allocation15 [shape = 's32[2]{0}', space=sflag, size = 0x8, scoped, tag = 'scoped memory for tpu_custom_call.1']
    #allocation16 [shape = 'u8[16384]{0}', space=vmem, size = 0x4000, scoped, tag = 'output window, operand 2']
    %14 = vsyncpa [#allocation3], 0
    %s15 = scalar_lea.sflag [#allocation3], 1
    %16 = vsyncpa %s15, 0
    %17 = vsyncpa [#allocation6], 0
    %18 = vsyncpa [#allocation9], 0
    %19 = vsyncpa [#allocation12], 0
    %20 = vsyncpa [#allocation4], 0
    %s21 = scalar_lea.sflag [#allocation4], 1
    %22 = vsyncpa %s21, 0
    %23 = vsyncpa [#allocation15], 0
    %s24 = scalar_lea.sflag [#allocation15], 1
    %25 = vsyncpa %s24, 0
    loop: start=0, step=1, limit=4
    $region2: #{tpu_custom_call.1} parent=1 // loop_pre_header
      _
    $region3: #{tpu_custom_call.1} parent=1 // loop_header
      %s27 = sphi 0, %s31
      %p28 = scmp.ge.s32.totalorder %s27, 4
      %s34 = sphi 0, %s46
      %s35 = sphi 0, %s42
      %s36 = sphi 0, %s34
      %s37 = sphi 0, %s35
      %s38 = sphi 0, %s36
      %s39 = sphi 0, %s37
      %s51 = sphi 0, %s53
      %s54 = sphi 0, %s51
      %s55 = sphi 0, %s54
      %s71 = sphi 0, %s55
      %s75 = sphi 0, %s75
      %s77 = sphi 0, %s75
      %s78 = sphi 0, %s77
      %s92 = sphi 0, %s78
      %s98 = sphi 0, %s100
      %s101 = sphi 0, %s98
      %s102 = sphi 0, %s101
      %s118 = sphi 0, %s102
      %s124 = sphi 0, %s126
      %s127 = sphi 0, %s124
      %s128 = sphi 0, %s127
      %s144 = sphi 0, %s128
      %s150 = sphi 0, %s152
      %s153 = sphi 0, %s150
      %s154 = sphi 0, %s153
      %s170 = sphi 0, %s154
      %s176 = sphi 0, %s178
      %s179 = sphi 0, %s176
      %s180 = sphi 0, %s179
      %s196 = sphi 0, %s180
      %s204 = sphi 0, %s206
      %s207 = sphi 0, %s204
      %s208 = sphi 0, %s207
      %s224 = sphi 0, %s208
      %s232 = sphi 0, %s234
      %s235 = sphi 0, %s232
      %s236 = sphi 0, %s235
      %s252 = sphi 0, %s236
      %s260 = sphi 0, %s262
      %s263 = sphi 0, %s260
      %s264 = sphi 0, %s263
      %s280 = sphi 0, %s264
    $region4: #{tpu_custom_call.1} parent=1 // loop_header_branch
      %30 = sbr.rel (%p28) target = $region8
    $region5: #{tpu_custom_call.1} parent=1 // loop_body
      %s32 = ssub.s32 %s27, 1
      %s33 = ssub.s32 %s27, 2
      %s40 = sadd.s32 1, %s35
      %p41 = scmp.ge.s32.totalorder %s40, 1
      %s42 = scalar_select %p41, 0, %s40
      %s43 = sadd.s32 1, %s34
      %s44 = scalar_select %p41, %s43, %s34
      %p45 = scmp.ge.s32.totalorder %s44, 2
      %s46 = scalar_select %p45, 0, %s44
      %s47 = ssub.s32 %s34, %s46
      %s48 = ssub.s32 %s35, %s42
      %s49 = sor.u32 %s47, %s48
      %p50 = scmp.eq.s32.totalorder %s49, 0
      %s52 = sadd.s32 %s51, 1
      %s53 = scalar_select %p50, %s51, %s52
      %p56 = pneg %p50
      %p57 = scmp.eq.s32.totalorder %s27, 1
      %p58 = por %p56, %p57
      %p59 = scmp.ne.s32.totalorder %s51, %s54
      %p60 = scmp.eq.s32.totalorder %s27, 0
      %p61 = por %p59, %p60
      %p62 = scmp.ne.s32.totalorder %s51, %s54
      %p63 = scmp.eq.s32.totalorder %s32, 1
      %p64 = por %p62, %p63
      %p65 = scmp.ne.s32.totalorder %s54, %s55
      %p66 = scmp.eq.s32.totalorder %s32, 0
      %p67 = por %p65, %p66
      %p68 = scmp.ne.s32.totalorder %s54, %s55
      %p69 = scmp.eq.s32.totalorder %s33, 1
      %p70 = por %p68, %p69
      %p72 = scmp.ne.s32.totalorder %s55, %s71
      %p73 = scmp.eq.s32.totalorder %s33, 0
      %p74 = por %p72, %p73
      %s76 = sadd.s32 %s75, 1
      %p79 = scmp.eq.s32.totalorder %s27, 1
      %p80 = scmp.ne.s32.totalorder %s75, %s77
      %p81 = scmp.eq.s32.totalorder %s27, 0
      %p82 = por %p80, %p81
      %p83 = scmp.ne.s32.totalorder %s75, %s77
      %p84 = scmp.eq.s32.totalorder %s32, 1
      %p85 = por %p83, %p84
      %p86 = scmp.ne.s32.totalorder %s77, %s78
      %p87 = scmp.eq.s32.totalorder %s32, 0
      %p88 = por %p86, %p87
      %p89 = scmp.ne.s32.totalorder %s77, %s78
      %p90 = scmp.eq.s32.totalorder %s33, 1
      %p91 = por %p89, %p90
      %p93 = scmp.ne.s32.totalorder %s78, %s92
      %p94 = scmp.eq.s32.totalorder %s33, 0
      %p95 = por %p93, %p94
      %s96 = ssub.s32 %s35, %s42
      %p97 = scmp.eq.s32.totalorder %s96, 0
      %s99 = sadd.s32 %s98, 1
      %s100 = scalar_select %p97, %s98, %s99
      %p103 = pneg %p97
      %p104 = scmp.eq.s32.totalorder %s27, 1
      %p105 = por %p103, %p104
      %p106 = scmp.ne.s32.totalorder %s98, %s101
      %p107 = scmp.eq.s32.totalorder %s27, 0
      %p108 = por %p106, %p107
      %p109 = scmp.ne.s32.totalorder %s98, %s101
      %p110 = scmp.eq.s32.totalorder %s32, 1
      %p111 = por %p109, %p110
      %p112 = scmp.ne.s32.totalorder %s101, %s102
      %p113 = scmp.eq.s32.totalorder %s32, 0
      %p114 = por %p112, %p113
      %p115 = scmp.ne.s32.totalorder %s101, %s102
      %p116 = scmp.eq.s32.totalorder %s33, 1
      %p117 = por %p115, %p116
      %p119 = scmp.ne.s32.totalorder %s102, %s118
      %p120 = scmp.eq.s32.totalorder %s33, 0
      %p121 = por %p119, %p120
      %s122 = ssub.s32 %s35, %s42
      %p123 = scmp.eq.s32.totalorder %s122, 0
      %s125 = sadd.s32 %s124, 1
      %s126 = scalar_select %p123, %s124, %s125
      %p129 = pneg %p123
      %p130 = scmp.eq.s32.totalorder %s27, 1
      %p131 = por %p129, %p130
      %p132 = scmp.ne.s32.totalorder %s124, %s127
      %p133 = scmp.eq.s32.totalorder %s27, 0
      %p134 = por %p132, %p133
      %p135 = scmp.ne.s32.totalorder %s124, %s127
      %p136 = scmp.eq.s32.totalorder %s32, 1
      %p137 = por %p135, %p136
      %p138 = scmp.ne.s32.totalorder %s127, %s128
      %p139 = scmp.eq.s32.totalorder %s32, 0
      %p140 = por %p138, %p139
      %p141 = scmp.ne.s32.totalorder %s127, %s128
      %p142 = scmp.eq.s32.totalorder %s33, 1
      %p143 = por %p141, %p142
      %p145 = scmp.ne.s32.totalorder %s128, %s144
      %p146 = scmp.eq.s32.totalorder %s33, 0
      %p147 = por %p145, %p146
      %s148 = ssub.s32 %s35, %s42
      %p149 = scmp.eq.s32.totalorder %s148, 0
      %s151 = sadd.s32 %s150, 1
      %s152 = scalar_select %p149, %s150, %s151
      %p155 = pneg %p149
      %p156 = scmp.eq.s32.totalorder %s27, 1
      %p157 = por %p155, %p156
      %p158 = scmp.ne.s32.totalorder %s150, %s153
      %p159 = scmp.eq.s32.totalorder %s27, 0
      %p160 = por %p158, %p159
      %p161 = scmp.ne.s32.totalorder %s150, %s153
      %p162 = scmp.eq.s32.totalorder %s32, 1
      %p163 = por %p161, %p162
      %p164 = scmp.ne.s32.totalorder %s153, %s154
      %p165 = scmp.eq.s32.totalorder %s32, 0
      %p166 = por %p164, %p165
      %p167 = scmp.ne.s32.totalorder %s153, %s154
      %p168 = scmp.eq.s32.totalorder %s33, 1
      %p169 = por %p167, %p168
      %p171 = scmp.ne.s32.totalorder %s154, %s170
      %p172 = scmp.eq.s32.totalorder %s33, 0
      %p173 = por %p171, %p172
      %s174 = ssub.s32 %s35, %s42
      %p175 = scmp.eq.s32.totalorder %s174, 0
      %s177 = sadd.s32 %s176, 1
      %s178 = scalar_select %p175, %s176, %s177
      %p181 = pneg %p175
      %p182 = scmp.eq.s32.totalorder %s27, 1
      %p183 = por %p181, %p182
      %p184 = scmp.ne.s32.totalorder %s176, %s179
      %p185 = scmp.eq.s32.totalorder %s27, 0
      %p186 = por %p184, %p185
      %p187 = scmp.ne.s32.totalorder %s176, %s179
      %p188 = scmp.eq.s32.totalorder %s32, 1
      %p189 = por %p187, %p188
      %p190 = scmp.ne.s32.totalorder %s179, %s180
      %p191 = scmp.eq.s32.totalorder %s32, 0
      %p192 = por %p190, %p191
      %p193 = scmp.ne.s32.totalorder %s179, %s180
      %p194 = scmp.eq.s32.totalorder %s33, 1
      %p195 = por %p193, %p194
      %p197 = scmp.ne.s32.totalorder %s180, %s196
      %p198 = scmp.eq.s32.totalorder %s33, 0
      %p199 = por %p197, %p198
      %s200 = ssub.s32 %s34, %s46
      %s201 = ssub.s32 %s35, %s42
      %s202 = sor.u32 %s200, %s201
      %p203 = scmp.eq.s32.totalorder %s202, 0
      %s205 = sadd.s32 %s204, 1
      %s206 = scalar_select %p203, %s204, %s205
      %p209 = pneg %p203
      %p210 = scmp.eq.s32.totalorder %s27, 1
      %p211 = por %p209, %p210
      %p212 = scmp.ne.s32.totalorder %s204, %s207
      %p213 = scmp.eq.s32.totalorder %s27, 0
      %p214 = por %p212, %p213
      %p215 = scmp.ne.s32.totalorder %s204, %s207
      %p216 = scmp.eq.s32.totalorder %s32, 1
      %p217 = por %p215, %p216
      %p218 = scmp.ne.s32.totalorder %s207, %s208
      %p219 = scmp.eq.s32.totalorder %s32, 0
      %p220 = por %p218, %p219
      %p221 = scmp.ne.s32.totalorder %s207, %s208
      %p222 = scmp.eq.s32.totalorder %s33, 1
      %p223 = por %p221, %p222
      %p225 = scmp.ne.s32.totalorder %s208, %s224
      %p226 = scmp.eq.s32.totalorder %s33, 0
      %p227 = por %p225, %p226
      %s228 = ssub.s32 %s34, %s46
      %s229 = ssub.s32 %s35, %s42
      %s230 = sor.u32 %s228, %s229
      %p231 = scmp.eq.s32.totalorder %s230, 0
      %s233 = sadd.s32 %s232, 1
      %s234 = scalar_select %p231, %s232, %s233
      %p237 = pneg %p231
      %p238 = scmp.eq.s32.totalorder %s27, 1
      %p239 = por %p237, %p238
      %p240 = scmp.ne.s32.totalorder %s232, %s235
      %p241 = scmp.eq.s32.totalorder %s27, 0
      %p242 = por %p240, %p241
      %p243 = scmp.ne.s32.totalorder %s232, %s235
      %p244 = scmp.eq.s32.totalorder %s32, 1
      %p245 = por %p243, %p244
      %p246 = scmp.ne.s32.totalorder %s235, %s236
      %p247 = scmp.eq.s32.totalorder %s32, 0
      %p248 = por %p246, %p247
      %p249 = scmp.ne.s32.totalorder %s235, %s236
      %p250 = scmp.eq.s32.totalorder %s33, 1
      %p251 = por %p249, %p250
      %p253 = scmp.ne.s32.totalorder %s236, %s252
      %p254 = scmp.eq.s32.totalorder %s33, 0
      %p255 = por %p253, %p254
      %s256 = ssub.s32 %s34, %s46
      %s257 = ssub.s32 %s35, %s42
      %s258 = sor.u32 %s256, %s257
      %p259 = scmp.eq.s32.totalorder %s258, 0
      %s261 = sadd.s32 %s260, 1
      %s262 = scalar_select %p259, %s260, %s261
      %p265 = pneg %p259
      %p266 = scmp.eq.s32.totalorder %s27, 1
      %p267 = por %p265, %p266
      %p268 = scmp.ne.s32.totalorder %s260, %s263
      %p269 = scmp.eq.s32.totalorder %s27, 0
      %p270 = por %p268, %p269
      %p271 = scmp.ne.s32.totalorder %s260, %s263
      %p272 = scmp.eq.s32.totalorder %s32, 1
      %p273 = por %p271, %p272
      %p274 = scmp.ne.s32.totalorder %s263, %s264
      %p275 = scmp.eq.s32.totalorder %s32, 0
      %p276 = por %p274, %p275
      %p277 = scmp.ne.s32.totalorder %s263, %s264
      %p278 = scmp.eq.s32.totalorder %s33, 1
      %p279 = por %p277, %p278
      %p281 = scmp.ne.s32.totalorder %s264, %s280
      %p282 = scmp.eq.s32.totalorder %s33, 0
      %p283 = por %p281, %p282
      %p284 = scmp.le.s32.totalorder 1, %s27
      %p285 = scmp.lt.s32.totalorder %s27, 3
      %p286 = pnand %p284, %p285
      %p287 = pneg %p286
      // Predicated region
      $region9: #{tpu_custom_call.1} parent=5 // pred_check
        _
      $region10: #{tpu_custom_call.1} parent=5 // pred_check_branch
        %289 = sbr.rel (%p286) target = $region12
      $region11: #{tpu_custom_call.1} parent=5 // pred_region
        %s290 = ssub.s32 %s27, 1
        // Predicated region
        $region13: #{tpu_custom_call.1} parent=11 // pred_check
          %p291 = pneg %p88
        $region14: #{tpu_custom_call.1} parent=11 // pred_check_branch
          %293 = sbr.rel (%p291) target = $region16
        $region15: #{tpu_custom_call.1} parent=11 // pred_region
          %s295 = ssub.s32 512, 512
          %296 = vsyncadd [#allocation6], %s295
          %s297 = sshll.u32 [#allocation5], 4
          %s298 = int_to_ptr.vmem [resolvable:$true] %s297
          %303 = dma.hbm_to_vmem [thread:$0]  %s1, 512, %s298, [#allocation6], 64, 64, 4
        $region16: #{tpu_custom_call.1} parent=11 // pred_fallthru
          _
        // Predicated region
        $region17: #{tpu_custom_call.1} parent=11 // pred_check
          %p304 = pneg %p114
        $region18: #{tpu_custom_call.1} parent=11 // pred_check_branch
          %306 = sbr.rel (%p304) target = $region20
        $region19: #{tpu_custom_call.1} parent=11 // pred_region
          %s307 = smul.u32 2, %s37
          %s309 = ssub.s32 256, 256
          %310 = vsyncadd [#allocation6], %s309
          %s311 = smul.addr %s307, 128
          %s312 = scalar_lea.hbm %s2, %s311
          %s313 = sshll.u32 [#allocation7], 4
          %s314 = int_to_ptr.vmem [resolvable:$true] %s313
          %319 = dma.hbm_to_vmem [thread:$0]  %s312, 256, %s314, [#allocation6], 128, 128, 8
        $region20: #{tpu_custom_call.1} parent=11 // pred_fallthru
          _
        // Predicated region
        $region21: #{tpu_custom_call.1} parent=11 // pred_check
          %p320 = pneg %p140
        $region22: #{tpu_custom_call.1} parent=11 // pred_check_branch
          %322 = sbr.rel (%p320) target = $region24
        $region23: #{tpu_custom_call.1} parent=11 // pred_region
          %s323 = smul.u32 2, %s37
          %s325 = ssub.s32 256, 256
          %326 = vsyncadd [#allocation9], %s325
          %s327 = smul.addr %s323, 128
          %s328 = scalar_lea.hbm %s3, %s327
          %s329 = sshll.u32 [#allocation8], 4
          %s330 = int_to_ptr.vmem [resolvable:$true] %s329
          %335 = dma.hbm_to_vmem [thread:$0]  %s328, 256, %s330, [#allocation9], 128, 128, 8
        $region24: #{tpu_custom_call.1} parent=11 // pred_fallthru
          _
        // Predicated region
        $region25: #{tpu_custom_call.1} parent=11 // pred_check
          %p336 = pneg %p166
        $region26: #{tpu_custom_call.1} parent=11 // pred_check_branch
          %338 = sbr.rel (%p336) target = $region28
        $region27: #{tpu_custom_call.1} parent=11 // pred_region
          %s339 = smul.u32 2, %s37
          %s341 = ssub.s32 256, 256
          %342 = vsyncadd [#allocation9], %s341
          %s343 = smul.addr %s339, 128
          %s344 = scalar_lea.hbm %s4, %s343
          %s345 = sshll.u32 [#allocation10], 4
          %s346 = int_to_ptr.vmem [resolvable:$true] %s345
          %351 = dma.hbm_to_vmem [thread:$0]  %s344, 256, %s346, [#allocation9], 128, 128, 8
        $region28: #{tpu_custom_call.1} parent=11 // pred_fallthru
          _
        // Predicated region
        $region29: #{tpu_custom_call.1} parent=11 // pred_check
          %p352 = pneg %p192
        $region30: #{tpu_custom_call.1} parent=11 // pred_check_branch
          %354 = sbr.rel (%p352) target = $region32
        $region31: #{tpu_custom_call.1} parent=11 // pred_region
          %s355 = smul.u32 2, %s37
          %s357 = ssub.s32 256, 256
          %358 = vsyncadd [#allocation12], %s357
          %s359 = smul.addr %s355, 128
          %s360 = scalar_lea.hbm %s5, %s359
          %s361 = sshll.u32 [#allocation11], 4
          %s362 = int_to_ptr.vmem [resolvable:$true] %s361
          %367 = dma.hbm_to_vmem [thread:$0]  %s360, 256, %s362, [#allocation12], 128, 128, 8
        $region32: #{tpu_custom_call.1} parent=11 // pred_fallthru
          _
      $region12: #{tpu_custom_call.1} parent=5 // pred_fallthru
        _
      %p368 = scmp.lt.s32.totalorder %s27, 2
      // Predicated region
      $region33: #{tpu_custom_call.1} parent=5 // pred_check
        %p369 = pneg %p368
      $region34: #{tpu_custom_call.1} parent=5 // pred_check_branch
        %371 = sbr.rel (%p369) target = $region36
      $region35: #{tpu_custom_call.1} parent=5 // pred_region
        // Predicated region
        $region37: #{tpu_custom_call.1} parent=35 // pred_check
          %p372 = pneg %p61
        $region38: #{tpu_custom_call.1} parent=35 // pred_check_branch
          %374 = sbr.rel (%p372) target = $region40
        $region39: #{tpu_custom_call.1} parent=35 // pred_region
          %s375 = sand.u32 %s51, 1
          %s376 = scalar_lea.sflag [#allocation3], %s375
          %s377 = sand.u32 %s51, 1
          %s378 = smul.addr %s377, 16
          %s379 = scalar_lea.vmem [#allocation2], %s378
          %s380 = smul.u32 2, %s35
          %s382 = ssub.s32 256, 256
          %383 = vsyncadd %s376, %s382
          %s384 = smul.addr %s34, 2
          %s385 = sadd.s32 %s380, %s384
          %s386 = smul.addr %s385, 128
          %s387 = scalar_lea.hbm %s0, %s386
          %s388 = sshll.u32 %s379, 4
          %s389 = int_to_ptr.vmem [resolvable:$true] %s388
          %394 = dma.hbm_to_vmem [thread:$0]  %s387, 256, %s389, %s376, 128, 128, 8
        $region40: #{tpu_custom_call.1} parent=35 // pred_fallthru
          _
      $region36: #{tpu_custom_call.1} parent=5 // pred_fallthru
        _
      %p395 = scmp.le.s32.totalorder 1, %s27
      %p396 = scmp.lt.s32.totalorder %s27, 3
      %p397 = pnand %p395, %p396
      %p398 = pneg %p397
      // Predicated region
      $region41: #{tpu_custom_call.1} parent=5 // pred_check
        _
      $region42: #{tpu_custom_call.1} parent=5 // pred_check_branch
        %400 = sbr.rel (%p397) target = $region44
      $region43: #{tpu_custom_call.1} parent=5 // pred_region
        %s401 = ssub.s32 %s27, 1
        %s402 = sand.u32 %s54, 1
        %s403 = scalar_lea.sflag [#allocation3], %s402
        %s404 = sand.u32 %s54, 1
        %s405 = smul.addr %s404, 16
        %s406 = scalar_lea.vmem [#allocation2], %s405
        // Predicated region
        $region45: #{tpu_custom_call.1} parent=43 // pred_check
          %p407 = pneg %p67
        $region46: #{tpu_custom_call.1} parent=43 // pred_check_branch
          %409 = sbr.rel (%p407) target = $region48
        $region47: #{tpu_custom_call.1} parent=43 // pred_region
          %410 = dma.done %s403, 256
        $region48: #{tpu_custom_call.1} parent=43 // pred_fallthru
          _
        // Predicated region
        $region49: #{tpu_custom_call.1} parent=43 // pred_check
          %p411 = pneg %p88
        $region50: #{tpu_custom_call.1} parent=43 // pred_check_branch
          %413 = sbr.rel (%p411) target = $region52
        $region51: #{tpu_custom_call.1} parent=43 // pred_region
          %414 = dma.done [#allocation6], 512
        $region52: #{tpu_custom_call.1} parent=43 // pred_fallthru
          _
        // Predicated region
        $region53: #{tpu_custom_call.1} parent=43 // pred_check
          %p415 = pneg %p114
        $region54: #{tpu_custom_call.1} parent=43 // pred_check_branch
          %417 = sbr.rel (%p415) target = $region56
        $region55: #{tpu_custom_call.1} parent=43 // pred_region
          %418 = dma.done [#allocation6], 256
        $region56: #{tpu_custom_call.1} parent=43 // pred_fallthru
          _
        // Predicated region
        $region57: #{tpu_custom_call.1} parent=43 // pred_check
          %p419 = pneg %p140
        $region58: #{tpu_custom_call.1} parent=43 // pred_check_branch
          %421 = sbr.rel (%p419) target = $region60
        $region59: #{tpu_custom_call.1} parent=43 // pred_region
          %422 = dma.done [#allocation9], 256
        $region60: #{tpu_custom_call.1} parent=43 // pred_fallthru
          _
        // Predicated region
        $region61: #{tpu_custom_call.1} parent=43 // pred_check
          %p423 = pneg %p166
        $region62: #{tpu_custom_call.1} parent=43 // pred_check_branch
          %425 = sbr.rel (%p423) target = $region64
        $region63: #{tpu_custom_call.1} parent=43 // pred_region
          %426 = dma.done [#allocation9], 256
        $region64: #{tpu_custom_call.1} parent=43 // pred_fallthru
          _
        // Predicated region
        $region65: #{tpu_custom_call.1} parent=43 // pred_check
          %p427 = pneg %p192
        $region66: #{tpu_custom_call.1} parent=43 // pred_check_branch
          %429 = sbr.rel (%p427) target = $region68
        $region67: #{tpu_custom_call.1} parent=43 // pred_region
          %430 = dma.done [#allocation12], 256
        $region68: #{tpu_custom_call.1} parent=43 // pred_fallthru
          _
        %s431 = sand.u32 %s54, 1
        %s432 = scalar_lea.sflag [#allocation3], %s431
        %s433 = sand.u32 %s54, 1
        %s434 = smul.addr %s433, 16
        %s435 = scalar_lea.vmem [#allocation2], %s434
        %p436 = pneg %p67
        %p437 = pneg %p64
        %p438 = pneg %p88
        %p439 = pneg %p85
        %p440 = pneg %p114
        %p441 = pneg %p111
        %p442 = pneg %p140
        %p443 = pneg %p137
        %p444 = pneg %p166
        %p445 = pneg %p163
        %p446 = pneg %p192
        %p447 = pneg %p189
        %p448 = pneg %p220
        %p449 = pneg %p217
        %s450 = sand.u32 %s207, 1
        %s451 = scalar_lea.sflag [#allocation4], %s450
        %s452 = sand.u32 %s207, 1
        %s453 = smul.addr %s452, 32
        %s454 = scalar_lea.vmem [#allocation13], %s453
        %p455 = pneg %p248
        %p456 = pneg %p245
        %s457 = sand.u32 %s32, 1
        %s458 = scalar_lea.sflag [#allocation15], %s457
        %s459 = sand.u32 %s235, 1
        %s460 = smul.addr %s459, 16
        %s461 = scalar_lea.vmem [#allocation14], %s460
        %p462 = pneg %p276
        %p463 = pneg %p273
        %s464 = sand.u32 %s32, 1
        %s465 = scalar_lea.sflag [#allocation15], %s464
        %s466 = sand.u32 %s263, 1
        %s467 = smul.addr %s466, 16
        %s468 = scalar_lea.vmem [#allocation16], %s467
        %s469 = smul.u32 2, %s37
        %s470 = smul.u32 2, %s37
        %s471 = smul.u32 2, %s37
        %s472 = smul.u32 2, %s37
        %s473 = smul.u32 2, %s37
        %s474 = smul.u32 2, %s37
        %s475 = smul.u32 2, %s37
        %s476 = smul.u32 2, %s37
        %v478 = vld [vmem:[%s406] sm:$0xff]
        %v479 = vld [vmem:[%s406 + $0x8] sm:$0xff]
        %v480 = vpack.c.bf16 %v479, %v478
        %v481 = vld [vmem:[#allocation5] sm:$0xf]
        %v482 = vld [vmem:[#allocation5 + $0x4] sm:$0xf]
        %v483 = vld [vmem:[#allocation5 + $0x8] sm:$0xf]
        %v484 = vld [vmem:[#allocation5 + $0xc] sm:$0xf]
        %v485 = vld [vmem:[#allocation5 + $0x10] sm:$0xf]
        %v486 = vld [vmem:[#allocation5 + $0x14] sm:$0xf]
        %v487 = vld [vmem:[#allocation5 + $0x18] sm:$0xf]
        %v488 = vld [vmem:[#allocation5 + $0x1c] sm:$0xf]
        %v497 = vunpack.c.l.b16 %v481
        %v498 = vunpack.c.l.b16 %v482
        %v499 = vunpack.c.l.b16 %v483
        %v500 = vunpack.c.l.b16 %v484
        %v501 = vunpack.c.l.b16 %v485
        %v502 = vunpack.c.l.b16 %v486
        %v503 = vunpack.c.l.b16 %v487
        %v504 = vunpack.c.l.b16 %v488
        %v505 = vpack.c.b16 %v498, %v497
        %v506 = vpack.c.b16 %v500, %v499
        %v507 = vpack.c.b16 %v502, %v501
        %v508 = vpack.c.b16 %v504, %v503
        %vm513 = vcmask 523264
        %v515 = vsel %vm513, %v480, 0
        %517 = vmatprep.subr.bf16.mxu0 0
        %518 = vmatpush1.bf16.msra.mxu0 0
        %519 = vmatprep.subr.bf16.mxu0 0
        %520 = vmatpush1.bf16.msra.mxu0 0
        %521 = vmatprep.subr.bf16.mxu0 0
        %522 = vmatpush1.bf16.msra.mxu0 0
        %523 = vmatprep.subr.bf16.mxu0 0
        %524 = vmatpush1.bf16.msra.mxu0 0
        %525 = vmatprep.subr.bf16.mxu0 0
        %526 = vmatpush1.bf16.msra.mxu0 %v508
        %527 = vmatprep.subr.bf16.mxu0 0
        %528 = vmatpush1.bf16.msra.mxu0 %v507
        %529 = vmatprep.subr.bf16.mxu0 0
        %530 = vmatpush1.bf16.msra.mxu0 %v506
        %531 = vmatprep.subr.bf16.mxu0 0
        %532 = vmatpush1.bf16.msra.mxu0 %v505
        %533 = vmatprep.subr.bf16.mxu0 0
        %534 = vmatpush2.bf16.msra.mxu0 0
        %535 = vmatprep.subr.bf16.mxu0 0
        %536 = vmatpush2.bf16.msra.mxu0 0
        %537 = vmatprep.subr.bf16.mxu0 0
        %538 = vmatpush2.bf16.msra.mxu0 0
        %539 = vmatprep.subr.bf16.mxu0 0
        %540 = vmatpush2.bf16.msra.mxu0 0
        %541 = vmatprep.subr.bf16.mxu0 0
        %542 = vmatpush2.bf16.msra.mxu0 0
        %543 = vmatprep.subr.bf16.mxu0 0
        %544 = vmatpush2.bf16.msra.mxu0 0
        %545 = vmatprep.subr.bf16.mxu0 0
        %546 = vmatpush2.bf16.msra.mxu0 0
        %547 = vmatprep.subr.bf16.mxu0 0
        %548 = vmatpush2.bf16.msra.mxu0 0
        %549 = vmatprep.mubr.bf16.mxu0 0
        %550 = vmatmul.mubr.bf16.gmra.mxu0 %v515
        %v551 = vpop.f32.mrf.mxu0
        %v552 = vadd.f32 0.0, %v551
        %v553 = vpop.f32.mrf.mxu0
        %v554 = vpop.f32.mrf.mxu0
        %v555 = vadd.f32 0.0, %v554
        %v556 = vpop.f32.mrf.mxu0
        %557 = vdwg.mxu0
        %v558 = vld [vmem:[#allocation7] sm:$0xff]
        %v559 = vld [vmem:[#allocation7 + $0x8] sm:$0xff]
        %v560 = vld [vmem:[#allocation8] sm:$0xff]
        %v561 = vld [vmem:[#allocation8 + $0x8] sm:$0xff]
        %v562 = vld [vmem:[#allocation10] sm:$0xff]
        %v563 = vld [vmem:[#allocation10 + $0x8] sm:$0xff]
        %v564 = vld [vmem:[#allocation11] sm:$0xff]
        %v565 = vld [vmem:[#allocation11 + $0x8] sm:$0xff]
        %568 = vrot.lane.b32.xlu0 %v552, 120
        %v569 = vpop.permute.xlu0 %568
        %570 = vrot.lane.b32.xlu0 %v555, 120
        %v571 = vpop.permute.xlu0 %570
        %574 = vrot.lane.b32.xlu0 %v552, 8
        %v575 = vpop.permute.xlu0 %574
        %576 = vrot.lane.b32.xlu0 %v555, 8
        %v577 = vpop.permute.xlu0 %576
        %vm580 = vcmask 64512
        %v581 = vsel %vm580, %v569, %v575
        %v582 = vsel %vm580, %v571, %v577
        %v583 = vmul.f32 %v552, %v558
        %v584 = vmul.f32 %v555, %v559
        %v585 = vmul.f32 %v581, %v560
        %v586 = vmul.f32 %v582, %v561
        %v587 = vadd.f32 %v583, %v585
        %v588 = vadd.f32 %v584, %v586
        %v589 = vpack.c.bf16 %v588, %v587
        %v591 = vunpack.c.l.b16 %v589
        %v592 = vunpack.c.h.b16 %v589
        %v593 = vpack.c.b16 %v591, %v591
        %v594 = vpack.c.b16 %v592, %v592
        %vm597 = vcmask 125952
        %598 = vst.msk [vmem:[%s454] sm:$0xf] %vm597, %v593
        %599 = vst.msk [vmem:[%s454 + $0x4] sm:$0xf] %vm597, %v594
        %600 = vrot.lane.b32.xlu0 %v552, 104
        %v601 = vpop.permute.xlu0 %600
        %602 = vrot.lane.b32.xlu0 %v555, 104
        %v603 = vpop.permute.xlu0 %602
        %v606 = vsel %vm580, %v601, %v569
        %v607 = vsel %vm580, %v603, %v571
        %610 = vrot.lane.b32.xlu0 %v558, 16
        %v611 = vpop.permute.xlu0 %610
        %612 = vrot.lane.b32.xlu0 %v559, 16
        %v613 = vpop.permute.xlu0 %612
        %v616 = vmul.f32 %v552, %v611
        %v617 = vmul.f32 %v555, %v613
        %v618 = vmul.f32 %v606, %v560
        %v619 = vmul.f32 %v607, %v561
        %622 = vrot.lane.b32.xlu0 %v618, 16
        %v623 = vpop.permute.xlu0 %622
        %624 = vrot.lane.b32.xlu0 %v619, 16
        %v625 = vpop.permute.xlu0 %624
        %v628 = vadd.f32 %v616, %v623
        %v629 = vadd.f32 %v617, %v625
        %v630 = vpack.c.bf16 %v629, %v628
        %v632 = vunpack.c.l.b16 %v630
        %v633 = vunpack.c.h.b16 %v630
        %v634 = vpack.c.b16 %v632, %v632
        %v635 = vpack.c.b16 %v633, %v633
        %636 = vrot.lane.b32.xlu0 %v634, 112
        %v637 = vpop.permute.xlu0 %636
        %638 = vrot.lane.b32.xlu0 %v635, 112
        %v639 = vpop.permute.xlu0 %638
        %s642 = scalar_lea.vmem %s454, 8 [#allocation13]
        %643 = vst.msk [vmem:[%s642] sm:$0xf] %vm597, %v637
        %644 = vst.msk [vmem:[%s642 + $0x4] sm:$0xf] %vm597, %v639
        %645 = vrot.lane.b32.xlu0 %v552, 88
        %v646 = vpop.permute.xlu0 %645
        %647 = vrot.lane.b32.xlu0 %v555, 88
        %v648 = vpop.permute.xlu0 %647
        %v651 = vsel %vm580, %v646, %v601
        %v652 = vsel %vm580, %v648, %v603
        %653 = vrot.lane.b32.xlu0 %v558, 32
        %v654 = vpop.permute.xlu0 %653
        %655 = vrot.lane.b32.xlu0 %v559, 32
        %v656 = vpop.permute.xlu0 %655
        %v659 = vmul.f32 %v552, %v654
        %v660 = vmul.f32 %v555, %v656
        %v661 = vmul.f32 %v651, %v560
        %v662 = vmul.f32 %v652, %v561
        %665 = vrot.lane.b32.xlu0 %v661, 32
        %v666 = vpop.permute.xlu0 %665
        %667 = vrot.lane.b32.xlu0 %v662, 32
        %v668 = vpop.permute.xlu0 %667
        %v671 = vadd.f32 %v659, %v666
        %v672 = vadd.f32 %v660, %v668
        %v673 = vpack.c.bf16 %v672, %v671
        %v675 = vunpack.c.l.b16 %v673
        %v676 = vunpack.c.h.b16 %v673
        %v677 = vpack.c.b16 %v675, %v675
        %v678 = vpack.c.b16 %v676, %v676
        %679 = vrot.lane.b32.xlu0 %v677, 96
        %v680 = vpop.permute.xlu0 %679
        %681 = vrot.lane.b32.xlu0 %v678, 96
        %v682 = vpop.permute.xlu0 %681
        %s685 = scalar_lea.vmem %s454, 16 [#allocation13]
        %686 = vst.msk [vmem:[%s685] sm:$0xf] %vm597, %v680
        %687 = vst.msk [vmem:[%s685 + $0x4] sm:$0xf] %vm597, %v682
        %688 = vrot.lane.b32.xlu0 %v552, 72
        %v689 = vpop.permute.xlu0 %688
        %690 = vrot.lane.b32.xlu0 %v555, 72
        %v691 = vpop.permute.xlu0 %690
        %v694 = vsel %vm580, %v689, %v646
        %v695 = vsel %vm580, %v691, %v648
        %696 = vrot.lane.b32.xlu0 %v558, 48
        %v697 = vpop.permute.xlu0 %696
        %698 = vrot.lane.b32.xlu0 %v559, 48
        %v699 = vpop.permute.xlu0 %698
        %v702 = vmul.f32 %v552, %v697
        %v703 = vmul.f32 %v555, %v699
        %v704 = vmul.f32 %v694, %v560
        %v705 = vmul.f32 %v695, %v561
        %708 = vrot.lane.b32.xlu0 %v704, 48
        %v709 = vpop.permute.xlu0 %708
        %710 = vrot.lane.b32.xlu0 %v705, 48
        %v711 = vpop.permute.xlu0 %710
        %v714 = vadd.f32 %v702, %v709
        %v715 = vadd.f32 %v703, %v711
        %v716 = vpack.c.bf16 %v715, %v714
        %v718 = vunpack.c.l.b16 %v716
        %v719 = vunpack.c.h.b16 %v716
        %v720 = vpack.c.b16 %v718, %v718
        %v721 = vpack.c.b16 %v719, %v719
        %722 = vrot.lane.b32.xlu0 %v720, 80
        %v723 = vpop.permute.xlu0 %722
        %724 = vrot.lane.b32.xlu0 %v721, 80
        %v725 = vpop.permute.xlu0 %724
        %s728 = scalar_lea.vmem %s454, 24 [#allocation13]
        %729 = vst.msk [vmem:[%s728] sm:$0xf] %vm597, %v723
        %730 = vst.msk [vmem:[%s728 + $0x4] sm:$0xf] %vm597, %v725
        %731 = vrot.lane.b32.xlu0 %v552, 56
        %v732 = vpop.permute.xlu0 %731
        %733 = vrot.lane.b32.xlu0 %v555, 56
        %v734 = vpop.permute.xlu0 %733
        %v737 = vsel %vm580, %v732, %v689
        %v738 = vsel %vm580, %v734, %v691
        %741 = vrot.lane.b32.xlu0 %v562, 64
        %v742 = vpop.permute.xlu0 %741
        %743 = vrot.lane.b32.xlu0 %v563, 64
        %v744 = vpop.permute.xlu0 %743
        %v747 = vmul.f32 %v552, %v742
        %v748 = vmul.f32 %v555, %v744
        %v749 = vmul.f32 %v737, %v564
        %v750 = vmul.f32 %v738, %v565
        %753 = vrot.lane.b32.xlu0 %v749, 64
        %v754 = vpop.permute.xlu0 %753
        %755 = vrot.lane.b32.xlu0 %v750, 64
        %v756 = vpop.permute.xlu0 %755
        %v759 = vadd.f32 %v747, %v754
        %v760 = vadd.f32 %v748, %v756
        %v761 = vpack.c.bf16 %v760, %v759
        %v763 = vunpack.c.l.b16 %v761
        %v764 = vunpack.c.h.b16 %v761
        %v765 = vpack.c.b16 %v763, %v763
        %v766 = vpack.c.b16 %v764, %v764
        %767 = vrot.lane.b32.xlu0 %v765, 64
        %v768 = vpop.permute.xlu0 %767
        %769 = vrot.lane.b32.xlu0 %v766, 64
        %v770 = vpop.permute.xlu0 %769
        %773 = vst.msk [vmem:[%s461] sm:$0xf] %vm597, %v768
        %774 = vst.msk [vmem:[%s461 + $0x4] sm:$0xf] %vm597, %v770
        %v775 = vpack.c.bf16 %v555, %v552
        %v777 = vunpack.c.l.b16 %v775
        %v778 = vunpack.c.h.b16 %v775
        %v779 = vpack.c.b16 %v777, %v777
        %v780 = vpack.c.b16 %v778, %v778
        %781 = vrot.lane.b32.xlu0 %v779, 32
        %v782 = vpop.permute.xlu0 %781
        %783 = vrot.lane.b32.xlu0 %v780, 32
        %v784 = vpop.permute.xlu0 %783
        %787 = vst.msk [vmem:[%s468] sm:$0xf] %vm597, %v782
        %788 = vst.msk [vmem:[%s468 + $0x4] sm:$0xf] %vm597, %v784
        %789 = vrot.lane.b32.xlu0 %v552, 40
        %v790 = vpop.permute.xlu0 %789
        %791 = vrot.lane.b32.xlu0 %v555, 40
        %v792 = vpop.permute.xlu0 %791
        %v795 = vsel %vm580, %v790, %v732
        %v796 = vsel %vm580, %v792, %v734
        %797 = vrot.lane.b32.xlu0 %v562, 80
        %v798 = vpop.permute.xlu0 %797
        %799 = vrot.lane.b32.xlu0 %v563, 80
        %v800 = vpop.permute.xlu0 %799
        %v803 = vmul.f32 %v552, %v798
        %v804 = vmul.f32 %v555, %v800
        %v805 = vmul.f32 %v795, %v564
        %v806 = vmul.f32 %v796, %v565
        %809 = vrot.lane.b32.xlu0 %v805, 80
        %v810 = vpop.permute.xlu0 %809
        %811 = vrot.lane.b32.xlu0 %v806, 80
        %v812 = vpop.permute.xlu0 %811
        %v815 = vadd.f32 %v803, %v810
        %v816 = vadd.f32 %v804, %v812
        %v817 = vpack.c.bf16 %v816, %v815
        %v819 = vunpack.c.l.b16 %v817
        %v820 = vunpack.c.h.b16 %v817
        %v821 = vpack.c.b16 %v819, %v819
        %v822 = vpack.c.b16 %v820, %v820
        %823 = vrot.lane.b32.xlu0 %v821, 48
        %v824 = vpop.permute.xlu0 %823
        %825 = vrot.lane.b32.xlu0 %v822, 48
        %v826 = vpop.permute.xlu0 %825
        %s829 = scalar_lea.vmem %s461, 8 [#allocation14]
        %830 = vst.msk [vmem:[%s829] sm:$0xf] %vm597, %v824
        %831 = vst.msk [vmem:[%s829 + $0x4] sm:$0xf] %vm597, %v826
        %832 = vrot.lane.b32.xlu0 %v779, 16
        %v833 = vpop.permute.xlu0 %832
        %834 = vrot.lane.b32.xlu0 %v780, 16
        %v835 = vpop.permute.xlu0 %834
        %s838 = scalar_lea.vmem %s468, 8 [#allocation16]
        %839 = vst.msk [vmem:[%s838] sm:$0xf] %vm597, %v833
        %840 = vst.msk [vmem:[%s838 + $0x4] sm:$0xf] %vm597, %v835
        %s841 = sand.u32 %s207, 1
        %s842 = scalar_lea.sflag [#allocation4], %s841
        %s843 = sand.u32 %s207, 1
        %s844 = smul.addr %s843, 32
        %s845 = scalar_lea.vmem [#allocation13], %s844
        %s846 = sand.u32 %s32, 1
        %s847 = scalar_lea.sflag [#allocation15], %s846
        %s848 = sand.u32 %s235, 1
        %s849 = smul.addr %s848, 16
        %s850 = scalar_lea.vmem [#allocation14], %s849
        %s851 = sand.u32 %s32, 1
        %s852 = scalar_lea.sflag [#allocation15], %s851
        %s853 = sand.u32 %s263, 1
        %s854 = smul.addr %s853, 16
        %s855 = scalar_lea.vmem [#allocation16], %s854
        // Predicated region
        $region69: #{tpu_custom_call.1} parent=43 // pred_check
          %p856 = pneg %p217
        $region70: #{tpu_custom_call.1} parent=43 // pred_check_branch
          %858 = sbr.rel (%p856) target = $region72
        $region71: #{tpu_custom_call.1} parent=43 // pred_region
          %s859 = smul.u32 2, %s37
          %s861 = ssub.s32 512, 512
          %862 = vsyncadd %s842, %s861
          %s863 = smul.addr %s36, 8
          %s864 = sadd.s32 %s859, %s863
          %s865 = smul.addr %s864, 64
          %s866 = scalar_lea.hbm %s6, %s865
          %s867 = sshll.u32 %s845, 4
          %s868 = int_to_ptr.vmem [resolvable:$true] %s867
          %873 = dma.vmem_to_hbm [thread:$0]  %s868, 512, %s866, %s842, 64, 64, 4
        $region72: #{tpu_custom_call.1} parent=43 // pred_fallthru
          _
        // Predicated region
        $region73: #{tpu_custom_call.1} parent=43 // pred_check
          %p874 = pneg %p245
        $region74: #{tpu_custom_call.1} parent=43 // pred_check_branch
          %876 = sbr.rel (%p874) target = $region76
        $region75: #{tpu_custom_call.1} parent=43 // pred_region
          %s877 = smul.u32 2, %s37
          %s879 = ssub.s32 256, 256
          %880 = vsyncadd %s847, %s879
          %s881 = smul.addr %s36, 4
          %s882 = sadd.s32 %s877, %s881
          %s883 = smul.addr %s882, 64
          %s884 = scalar_lea.hbm %s7, %s883
          %s885 = sshll.u32 %s850, 4
          %s886 = int_to_ptr.vmem [resolvable:$true] %s885
          %891 = dma.vmem_to_hbm [thread:$0]  %s886, 256, %s884, %s847, 64, 64, 4
        $region76: #{tpu_custom_call.1} parent=43 // pred_fallthru
          _
        // Predicated region
        $region77: #{tpu_custom_call.1} parent=43 // pred_check
          %p892 = pneg %p273
        $region78: #{tpu_custom_call.1} parent=43 // pred_check_branch
          %894 = sbr.rel (%p892) target = $region80
        $region79: #{tpu_custom_call.1} parent=43 // pred_region
          %s895 = smul.u32 2, %s37
          %s897 = ssub.s32 256, 256
          %898 = vsyncadd %s852, %s897
          %s899 = smul.addr %s36, 4
          %s900 = sadd.s32 %s895, %s899
          %s901 = smul.addr %s900, 64
          %s902 = scalar_lea.hbm %s8, %s901
          %s903 = sshll.u32 %s855, 4
          %s904 = int_to_ptr.vmem [resolvable:$true] %s903
          %909 = dma.vmem_to_hbm [thread:$0]  %s904, 256, %s902, %s852, 64, 64, 4
        $region80: #{tpu_custom_call.1} parent=43 // pred_fallthru
          _
      $region44: #{tpu_custom_call.1} parent=5 // pred_fallthru
        _
      %p910 = scmp.le.s32.totalorder 2, %s27
      // Predicated region
      $region81: #{tpu_custom_call.1} parent=5 // pred_check
        %p911 = pneg %p910
      $region82: #{tpu_custom_call.1} parent=5 // pred_check_branch
        %913 = sbr.rel (%p911) target = $region84
      $region83: #{tpu_custom_call.1} parent=5 // pred_region
        %s914 = ssub.s32 %s27, 2
        // Predicated region
        $region85: #{tpu_custom_call.1} parent=83 // pred_check
          %p915 = pneg %p223
        $region86: #{tpu_custom_call.1} parent=83 // pred_check_branch
          %917 = sbr.rel (%p915) target = $region88
        $region87: #{tpu_custom_call.1} parent=83 // pred_region
          %s918 = sand.u32 %s208, 1
          %s919 = scalar_lea.sflag [#allocation4], %s918
          %s920 = sand.u32 %s208, 1
          %s921 = smul.addr %s920, 32
          %s922 = scalar_lea.vmem [#allocation13], %s921
          %923 = dma.done %s919, 512
        $region88: #{tpu_custom_call.1} parent=83 // pred_fallthru
          _
        // Predicated region
        $region89: #{tpu_custom_call.1} parent=83 // pred_check
          %p924 = pneg %p251
        $region90: #{tpu_custom_call.1} parent=83 // pred_check_branch
          %926 = sbr.rel (%p924) target = $region92
        $region91: #{tpu_custom_call.1} parent=83 // pred_region
          %s927 = sand.u32 %s33, 1
          %s928 = scalar_lea.sflag [#allocation15], %s927
          %s929 = sand.u32 %s236, 1
          %s930 = smul.addr %s929, 16
          %s931 = scalar_lea.vmem [#allocation14], %s930
          %932 = dma.done %s928, 256
        $region92: #{tpu_custom_call.1} parent=83 // pred_fallthru
          _
        // Predicated region
        $region93: #{tpu_custom_call.1} parent=83 // pred_check
          %p933 = pneg %p279
        $region94: #{tpu_custom_call.1} parent=83 // pred_check_branch
          %935 = sbr.rel (%p933) target = $region96
        $region95: #{tpu_custom_call.1} parent=83 // pred_region
          %s936 = sand.u32 %s33, 1
          %s937 = scalar_lea.sflag [#allocation15], %s936
          %s938 = sand.u32 %s264, 1
          %s939 = smul.addr %s938, 16
          %s940 = scalar_lea.vmem [#allocation16], %s939
          %941 = dma.done %s937, 256
        $region96: #{tpu_custom_call.1} parent=83 // pred_fallthru
          _
      $region84: #{tpu_custom_call.1} parent=5 // pred_fallthru
        _
    $region6: #{tpu_custom_call.1} parent=1 // loop_footer
      %s31 = sadd.s32 1, %s27
    $region7: #{tpu_custom_call.1} parent=1 // loop_footer_branch
      %26 = sbr.rel target = $region3
    $region8: #{tpu_custom_call.1} parent=1 // loop_exit
      _
    %942 = vsyncpa [#allocation3], 1
    %s943 = scalar_lea.sflag [#allocation3], 1
    %944 = vsyncpa %s943, 1
    %945 = vsyncpa [#allocation6], 1
    %946 = vsyncpa [#allocation9], 1
    %947 = vsyncpa [#allocation12], 1
    %948 = vsyncpa [#allocation4], 1
    %s949 = scalar_lea.sflag [#allocation4], 1
    %950 = vsyncpa %s949, 1
    %951 = vsyncpa [#allocation15], 1
    %s952 = scalar_lea.sflag [#allocation15], 1
    %953 = vsyncpa %s952, 1

</llo_original>
